<compile_context>
chip_gen: v6e
topology: v6e:2x2x1
jax: 0.10.0
libtpu: 0.0.40
codegen_flags: <defaults>
</compile_context>

<pallas_src>
import functools

import jax
import jax.numpy as jnp
from jax.experimental import pallas as pl
from jax.experimental.pallas import tpu as pltpu


def _cnn_layer_kernel(xcol_ref, wcol_ref, bc_ref, wr_ref, br_ref, o_ref,
                      *, C, pad, add_residual):
    # xcol_ref : (1, K*C, L)    im2col'd input for this batch element (lane dim = L)
    # wcol_ref : (F_large, K*C) conv taps, tap-major over rows of x_col
    # bc_ref   : (F_large, 1)
    # wr_ref   : (F_small, F_large)  1x1 reduce conv
    # br_ref   : (F_small, 1)
    # o_ref    : (1, F_small, L)     NCL output block (lane-dense along L)
    x_col = xcol_ref[0]                                     # (K*C, L)

    # Conv1d: all K taps fused into a single MXU pass (contraction dim = K*C).
    h = jnp.dot(wcol_ref[...], x_col,
                preferred_element_type=jnp.float32) + bc_ref[...]
    h = jnp.maximum(h, 0.0)                                 # ReLU

    # 1x1 "reduce" conv == matmul over channels; lane dim stays L.
    r = jnp.dot(wr_ref[...], h,
                preferred_element_type=jnp.float32) + br_ref[...]
    r = jnp.maximum(r, 0.0)                                 # ReLU

    if add_residual:
        # Centre-tap rows of x_col are exactly the unshifted input x (C == F_small).
        r = r + xcol_ref[0, pad * C:(pad + 1) * C, :]

    o_ref[0] = r.astype(o_ref.dtype)


def cnn_layer_forward(x, params):
    """x: (N, C, L) float32 (PyTorch NCL). Returns (N, small_features, L)."""
    N, C, L = x.shape
    w_conv = params["w_conv"]            # (F_large, C, K)   torch Conv1d layout
    b_conv = params["b_conv"]            # (F_large,)
    w_red = params["w_red"]              # (F_small, F_large, 1)
    b_red = params["b_red"]              # (F_small,)

    F_large, _, K = w_conv.shape
    F_small = w_red.shape[0]
    if K % 2 == 0:
        # padding=K//2 only preserves length for odd K (even K would give L+1 in torch).
        raise ValueError("kernel_size must be odd for this kernel")
    pad = K // 2
    add_residual = (C == F_small)

    # ---- XLA-side prep (no transposes of x; pad + K-fold im2col of a small array). ----
    x_pad = jnp.pad(x, ((0, 0), (0, 0), (pad, pad)))                    # (N, C, L+2p)
    x_col = jnp.concatenate(
        [x_pad[:, :, dk:dk + L] for dk in range(K)], axis=1)            # (N, K*C, L)

    # w_col[f, dk*C + c] = w_conv[f, c, dk]  -> matches x_col's tap-major row order.
    w_col = jnp.transpose(w_conv, (0, 2, 1)).reshape(F_large, K * C)
    b_conv2 = b_conv.reshape(F_large, 1)
    w_red2 = w_red[:, :, 0]                                             # (F_small, F_large)
    b_red2 = b_red.reshape(F_small, 1)

    kernel = functools.partial(_cnn_layer_kernel, C=C, pad=pad,
                               add_residual=add_residual)

    flops = 2 * N * L * (K * C * F_large + F_large * F_small)
    bytes_accessed = 4 * (N * K * C * L + F_large * K * C + F_large
                          + F_small * F_large + F_small + N * F_small * L)

    out = pl.pallas_call(
        kernel,
        out_shape=jax.ShapeDtypeStruct((N, F_small, L), jnp.float32),
        grid_spec=pltpu.PrefetchScalarGridSpec(
            num_scalar_prefetch=0,
            grid=(N,),
            in_specs=[
                pl.BlockSpec((1, K * C, L), lambda n: (n, 0, 0)),
                pl.BlockSpec((F_large, K * C), lambda n: (0, 0)),
                pl.BlockSpec((F_large, 1), lambda n: (0, 0)),
                pl.BlockSpec((F_small, F_large), lambda n: (0, 0)),
                pl.BlockSpec((F_small, 1), lambda n: (0, 0)),
            ],
            out_specs=pl.BlockSpec((1, F_small, L), lambda n: (n, 0, 0)),
        ),
        compiler_params=pltpu.CompilerParams(
            dimension_semantics=("parallel",)),
        cost_estimate=pl.CostEstimate(flops=flops, transcendentals=0,
                                      bytes_accessed=bytes_accessed),
    )(x_col, w_col, b_conv2, w_red2, b_red2)

    return out                                                           # already NCL


def init_params(key, input_channels, large_features, small_features, kernel_size):
    """Deterministic init matching torch Conv1d default bounds (U[-1/sqrt(fan_in), ...])."""
    k1, k2, k3, k4 = jax.random.split(key, 4)
    bnd_c = 1.0 / jnp.sqrt(input_channels * kernel_size)
    bnd_r = 1.0 / jnp.sqrt(large_features * 1)
    return {
        "w_conv": jax.random.uniform(k1, (large_features, input_channels, kernel_size),
                                     jnp.float32, -bnd_c, bnd_c),
        "b_conv": jax.random.uniform(k2, (large_features,), jnp.float32, -bnd_c, bnd_c),
        "w_red": jax.random.uniform(k3, (small_features, large_features, 1),
                                    jnp.float32, -bnd_r, bnd_r),
        "b_red": jax.random.uniform(k4, (small_features,), jnp.float32, -bnd_r, bnd_r),
    }


def ref_forward(x, params):
    """Pure-JAX reference (mirrors the PyTorch forward for this config)."""
    K = params["w_conv"].shape[2]
    pad = K // 2
    y = jax.lax.conv_general_dilated(
        x, params["w_conv"], window_strides=(1,), padding=[(pad, pad)],
        dimension_numbers=("NCH", "OIH", "NCH"))
    y = jnp.maximum(y + params["b_conv"][None, :, None], 0.0)
    z = jax.lax.conv_general_dilated(
        y, params["w_red"], window_strides=(1,), padding=[(0, 0)],
        dimension_numbers=("NCH", "OIH", "NCH"))
    z = jnp.maximum(z + params["b_red"][None, :, None], 0.0)
    if x.shape[1] == params["w_red"].shape[0]:
        z = z + x                                            # residual
    return z


if __name__ == "__main__":
    # Small shapes implied by the module: Conv1d input is (N, C, L).
    N, C, L = 2, 4, 16
    large_features, small_features, kernel_size = 32, 4, 3

    key = jax.random.PRNGKey(0)
    kx, kp = jax.random.split(key)
    x = jax.random.normal(kx, (N, C, L), jnp.float32)
    params = init_params(kp, C, large_features, small_features, kernel_size)

    out = jax.block_until_ready(cnn_layer_forward(x, params))
    ref = jax.block_until_ready(ref_forward(x, params))

    assert out.shape == (N, small_features, L), out.shape
    assert jnp.allclose(out, ref, atol=1e-5, rtol=1e-5), \
        float(jnp.max(jnp.abs(out - ref)))

    print("KERNEL_OK")
</pallas_src>

<mosaic_0001>
module attributes {stable_mosaic.version = 11 : i64} {
  func.func @_cnn_layer_kernel(%arg0: i32, %arg1: memref<1x12x16xf32, #tpu.memory_space<vmem>>, %arg2: memref<32x12xf32, #tpu.memory_space<vmem>>, %arg3: memref<32x1xf32, #tpu.memory_space<vmem>>, %arg4: memref<4x32xf32, #tpu.memory_space<vmem>>, %arg5: memref<4x1xf32, #tpu.memory_space<vmem>>, %arg6: memref<1x4x16xf32, #tpu.memory_space<vmem>>) attributes {dimension_semantics = [#tpu.dimension_semantics<parallel>], iteration_bounds = array<i64: 2>, scalar_prefetch = 0 : i64, scratch_operands = 0 : i64, tpu.core_type = #tpu.core_type<tc>, window_params = [{transform_indices = @transform_0, window_bounds = array<i64: 1, 12, 16>}, {pipeline_mode = #tpu.pipeline_mode<synchronous>, transform_indices = @transform_1, window_bounds = array<i64: 32, 12>}, {pipeline_mode = #tpu.pipeline_mode<synchronous>, transform_indices = @transform_2, window_bounds = array<i64: 32, 1>}, {pipeline_mode = #tpu.pipeline_mode<synchronous>, transform_indices = @transform_3, window_bounds = array<i64: 4, 32>}, {pipeline_mode = #tpu.pipeline_mode<synchronous>, transform_indices = @transform_4, window_bounds = array<i64: 4, 1>}, {transform_indices = @transform_5, window_bounds = array<i64: 1, 4, 16>}]} {
    %c0 = arith.constant 0 : index
    %c0_0 = arith.constant 0 : index
    %c0_1 = arith.constant 0 : index
    %0 = vector.load %arg1[%c0, %c0_0, %c0_1] : memref<1x12x16xf32, #tpu.memory_space<vmem>>, vector<1x12x16xf32>
    %1 = vector.shape_cast %0 : vector<1x12x16xf32> to vector<12x16xf32>
    %c0_2 = arith.constant 0 : index
    %c0_3 = arith.constant 0 : index
    %2 = vector.load %arg2[%c0_2, %c0_3] : memref<32x12xf32, #tpu.memory_space<vmem>>, vector<32x12xf32>
    %cst = arith.constant dense<0.000000e+00> : vector<32x16xf32>
    %3 = tpu.matmul %2, %1, %cst {dimension_numbers = #tpu.dot_dimension_numbers<[1], [0], [0], [1], [0, 0, 1, 1], [], []>} : vector<32x12xf32>, vector<12x16xf32>, vector<32x16xf32> -> vector<32x16xf32>
    %c0_4 = arith.constant 0 : index
    %c0_5 = arith.constant 0 : index
    %4 = vector.load %arg3[%c0_4, %c0_5] : memref<32x1xf32, #tpu.memory_space<vmem>>, vector<32x1xf32>
    %5 = vector.broadcast %4 : vector<32x1xf32> to vector<32x16xf32>
    %6 = arith.addf %3, %5 : vector<32x16xf32>
    %cst_6 = arith.constant 0.000000e+00 : f32
    %7 = vector.broadcast %cst_6 : f32 to vector<32x16xf32>
    %8 = arith.maximumf %6, %7 : vector<32x16xf32>
    %c0_7 = arith.constant 0 : index
    %c0_8 = arith.constant 0 : index
    %9 = vector.load %arg4[%c0_7, %c0_8] : memref<4x32xf32, #tpu.memory_space<vmem>>, vector<4x32xf32>
    %cst_9 = arith.constant dense<0.000000e+00> : vector<4x16xf32>
    %10 = tpu.matmul %9, %8, %cst_9 {dimension_numbers = #tpu.dot_dimension_numbers<[1], [0], [0], [1], [0, 0, 1, 1], [], []>} : vector<4x32xf32>, vector<32x16xf32>, vector<4x16xf32> -> vector<4x16xf32>
    %c0_10 = arith.constant 0 : index
    %c0_11 = arith.constant 0 : index
    %11 = vector.load %arg5[%c0_10, %c0_11] : memref<4x1xf32, #tpu.memory_space<vmem>>, vector<4x1xf32>
    %12 = vector.broadcast %11 : vector<4x1xf32> to vector<4x16xf32>
    %13 = arith.addf %10, %12 : vector<4x16xf32>
    %cst_12 = arith.constant 0.000000e+00 : f32
    %14 = vector.broadcast %cst_12 : f32 to vector<4x16xf32>
    %15 = arith.maximumf %13, %14 : vector<4x16xf32>
    %c0_13 = arith.constant 0 : index
    %c4 = arith.constant 4 : index
    %c0_14 = arith.constant 0 : index
    %16 = vector.load %arg1[%c0_13, %c4, %c0_14] : memref<1x12x16xf32, #tpu.memory_space<vmem>>, vector<1x4x16xf32>
    %17 = vector.shape_cast %16 : vector<1x4x16xf32> to vector<4x16xf32>
    %18 = arith.addf %15, %17 : vector<4x16xf32>
    %c0_15 = arith.constant 0 : index
    %c0_16 = arith.constant 0 : index
    %c0_17 = arith.constant 0 : index
    %19 = vector.load %arg6[%c0_15, %c0_16, %c0_17] : memref<1x4x16xf32, #tpu.memory_space<vmem>>, vector<1x4x16xf32>
    %20 = vector.shape_cast %19 : vector<1x4x16xf32> to vector<4x16xf32>
    %21 = vector.shape_cast %18 : vector<4x16xf32> to vector<1x4x16xf32>
    tpu.vector_store %arg6[%c0_15, %c0_16, %c0_17], %21 {strides = array<i32>} : memref<1x4x16xf32, #tpu.memory_space<vmem>>, vector<1x4x16xf32>,
    return
  }
  func.func @transform_0(%arg0: i32) -> (i32, i32, i32) {
    %c0_i32 = arith.constant 0 : i32
    %c0_i32_0 = arith.constant 0 : i32
    %c0_i32_1 = arith.constant 0 : i32
    return %arg0, %c0_i32, %c0_i32_0 : i32, i32, i32
  }
  func.func @transform_1(%arg0: i32) -> (i32, i32) {
    %c0_i32 = arith.constant 0 : i32
    %c0_i32_0 = arith.constant 0 : i32
    %c0_i32_1 = arith.constant 0 : i32
    return %c0_i32, %c0_i32_0 : i32, i32
  }
  func.func @transform_2(%arg0: i32) -> (i32, i32) {
    %c0_i32 = arith.constant 0 : i32
    %c0_i32_0 = arith.constant 0 : i32
    %c0_i32_1 = arith.constant 0 : i32
    return %c0_i32, %c0_i32_0 : i32, i32
  }
  func.func @transform_3(%arg0: i32) -> (i32, i32) {
    %c0_i32 = arith.constant 0 : i32
    %c0_i32_0 = arith.constant 0 : i32
    %c0_i32_1 = arith.constant 0 : i32
    return %c0_i32, %c0_i32_0 : i32, i32
  }
  func.func @transform_4(%arg0: i32) -> (i32, i32) {
    %c0_i32 = arith.constant 0 : i32
    %c0_i32_0 = arith.constant 0 : i32
    %c0_i32_1 = arith.constant 0 : i32
    return %c0_i32, %c0_i32_0 : i32, i32
  }
  func.func @transform_5(%arg0: i32) -> (i32, i32, i32) {
    %c0_i32 = arith.constant 0 : i32
    %c0_i32_0 = arith.constant 0 : i32
    %c0_i32_1 = arith.constant 0 : i32
    return %arg0, %c0_i32, %c0_i32_0 : i32, i32, i32
  }
}

</mosaic_0001>

<llo_original>
// kernel: tpu_custom_call.1
$region0: #{tpu_custom_call.1}
  #allocation0 [shape = 'u32[]', space=smem, size = 0x4, offset = 0x4, fixed_abs, tag = 'smem constant byte address 0x4 - core index']
  #allocation1 [shape = 'u32[144,128]{1,0:T(1,128)}', space=vmem, size = 0x12000, scoped, tag = 'internal scratch']
  %s0 = inlined_call_operand.vmem [shape: f32[2,12,16], index: 0, kind: input, shape index: {}]
  %s1 = inlined_call_operand.vmem [shape: f32[32,12], index: 1, kind: input, shape index: {}]
  %s2 = inlined_call_operand.vmem [shape: f32[32,1], index: 2, kind: input, shape index: {}]
  %s3 = inlined_call_operand.vmem [shape: f32[4,32], index: 3, kind: input, shape index: {}]
  %s4 = inlined_call_operand.vmem [shape: f32[4,1], index: 4, kind: input, shape index: {}]
  %s5 = inlined_call_operand.hbm [shape: f32[2,4,16], index: 5, kind: output, shape index: {}]
  %s6 = sld [smem:[#allocation0]]
  $region53: #{tpu_custom_call.1} parent=0
    _
  %s8 = ssub.s32 1, %s6
  %s9 = scalar_select 0, %s8, %s6
  $region1: #{tpu_custom_call.1} parent=0
    #allocation2 [shape = 'u8[4096]{0}', space=vmem, size = 0x1000, scoped, tag = 'output window, operand 0']
    #allocation3 [shape = 's32[2]{0}', space=sflag, size = 0x8, scoped, tag = 'scoped memory for tpu_custom_call.1']
    %10 = vsyncpa [#allocation3], 0
    %s11 = scalar_lea.sflag [#allocation3], 1
    %12 = vsyncpa %s11, 0
    loop: start=0, step=1, limit=4
    $region2: #{tpu_custom_call.1} parent=1 // loop_pre_header
      _
    $region3: #{tpu_custom_call.1} parent=1 // loop_header
      %s14 = sphi 0, %s18
      %p15 = scmp.ge.s32.totalorder %s14, 4
      %s24 = sphi 0, %s26
      %s27 = sphi 0, %s24
      %s28 = sphi 0, %s27
      %s44 = sphi 0, %s28
      %s48 = sphi 0, %s48
      %s50 = sphi 0, %s48
      %s51 = sphi 0, %s50
      %s65 = sphi 0, %s51
      %s69 = sphi 0, %s69
      %s71 = sphi 0, %s69
      %s72 = sphi 0, %s71
      %s86 = sphi 0, %s72
      %s90 = sphi 0, %s90
      %s92 = sphi 0, %s90
      %s93 = sphi 0, %s92
      %s107 = sphi 0, %s93
      %s111 = sphi 0, %s111
      %s113 = sphi 0, %s111
      %s114 = sphi 0, %s113
      %s128 = sphi 0, %s114
      %s134 = sphi 0, %s136
      %s137 = sphi 0, %s134
      %s138 = sphi 0, %s137
      %s154 = sphi 0, %s138
    $region4: #{tpu_custom_call.1} parent=1 // loop_header_branch
      %17 = sbr.rel (%p15) target = $region8
    $region5: #{tpu_custom_call.1} parent=1 // loop_body
      %s19 = ssub.s32 %s14, 1
      %s20 = ssub.s32 %s14, 2
      %s21 = sadd.s32 %s14, 1
      %s22 = ssub.s32 %s14, %s21
      %p23 = scmp.eq.s32.totalorder %s22, 0
      %s25 = sadd.s32 %s24, 1
      %s26 = scalar_select %p23, %s24, %s25
      %p29 = pneg %p23
      %p30 = scmp.eq.s32.totalorder %s14, 1
      %p31 = por %p29, %p30
      %p32 = scmp.ne.s32.totalorder %s24, %s27
      %p33 = scmp.eq.s32.totalorder %s14, 0
      %p34 = por %p32, %p33
      %p35 = scmp.ne.s32.totalorder %s24, %s27
      %p36 = scmp.eq.s32.totalorder %s19, 1
      %p37 = por %p35, %p36
      %p38 = scmp.ne.s32.totalorder %s27, %s28
      %p39 = scmp.eq.s32.totalorder %s19, 0
      %p40 = por %p38, %p39
      %p41 = scmp.ne.s32.totalorder %s27, %s28
      %p42 = scmp.eq.s32.totalorder %s20, 1
      %p43 = por %p41, %p42
      %p45 = scmp.ne.s32.totalorder %s28, %s44
      %p46 = scmp.eq.s32.totalorder %s20, 0
      %p47 = por %p45, %p46
      %s49 = sadd.s32 %s48, 1
      %p52 = scmp.eq.s32.totalorder %s14, 1
      %p53 = scmp.ne.s32.totalorder %s48, %s50
      %p54 = scmp.eq.s32.totalorder %s14, 0
      %p55 = por %p53, %p54
      %p56 = scmp.ne.s32.totalorder %s48, %s50
      %p57 = scmp.eq.s32.totalorder %s19, 1
      %p58 = por %p56, %p57
      %p59 = scmp.ne.s32.totalorder %s50, %s51
      %p60 = scmp.eq.s32.totalorder %s19, 0
      %p61 = por %p59, %p60
      %p62 = scmp.ne.s32.totalorder %s50, %s51
      %p63 = scmp.eq.s32.totalorder %s20, 1
      %p64 = por %p62, %p63
      %p66 = scmp.ne.s32.totalorder %s51, %s65
      %p67 = scmp.eq.s32.totalorder %s20, 0
      %p68 = por %p66, %p67
      %s70 = sadd.s32 %s69, 1
      %p73 = scmp.eq.s32.totalorder %s14, 1
      %p74 = scmp.ne.s32.totalorder %s69, %s71
      %p75 = scmp.eq.s32.totalorder %s14, 0
      %p76 = por %p74, %p75
      %p77 = scmp.ne.s32.totalorder %s69, %s71
      %p78 = scmp.eq.s32.totalorder %s19, 1
      %p79 = por %p77, %p78
      %p80 = scmp.ne.s32.totalorder %s71, %s72
      %p81 = scmp.eq.s32.totalorder %s19, 0
      %p82 = por %p80, %p81
      %p83 = scmp.ne.s32.totalorder %s71, %s72
      %p84 = scmp.eq.s32.totalorder %s20, 1
      %p85 = por %p83, %p84
      %p87 = scmp.ne.s32.totalorder %s72, %s86
      %p88 = scmp.eq.s32.totalorder %s20, 0
      %p89 = por %p87, %p88
      %s91 = sadd.s32 %s90, 1
      %p94 = scmp.eq.s32.totalorder %s14, 1
      %p95 = scmp.ne.s32.totalorder %s90, %s92
      %p96 = scmp.eq.s32.totalorder %s14, 0
      %p97 = por %p95, %p96
      %p98 = scmp.ne.s32.totalorder %s90, %s92
      %p99 = scmp.eq.s32.totalorder %s19, 1
      %p100 = por %p98, %p99
      %p101 = scmp.ne.s32.totalorder %s92, %s93
      %p102 = scmp.eq.s32.totalorder %s19, 0
      %p103 = por %p101, %p102
      %p104 = scmp.ne.s32.totalorder %s92, %s93
      %p105 = scmp.eq.s32.totalorder %s20, 1
      %p106 = por %p104, %p105
      %p108 = scmp.ne.s32.totalorder %s93, %s107
      %p109 = scmp.eq.s32.totalorder %s20, 0
      %p110 = por %p108, %p109
      %s112 = sadd.s32 %s111, 1
      %p115 = scmp.eq.s32.totalorder %s14, 1
      %p116 = scmp.ne.s32.totalorder %s111, %s113
      %p117 = scmp.eq.s32.totalorder %s14, 0
      %p118 = por %p116, %p117
      %p119 = scmp.ne.s32.totalorder %s111, %s113
      %p120 = scmp.eq.s32.totalorder %s19, 1
      %p121 = por %p119, %p120
      %p122 = scmp.ne.s32.totalorder %s113, %s114
      %p123 = scmp.eq.s32.totalorder %s19, 0
      %p124 = por %p122, %p123
      %p125 = scmp.ne.s32.totalorder %s113, %s114
      %p126 = scmp.eq.s32.totalorder %s20, 1
      %p127 = por %p125, %p126
      %p129 = scmp.ne.s32.totalorder %s114, %s128
      %p130 = scmp.eq.s32.totalorder %s20, 0
      %p131 = por %p129, %p130
      %s132 = ssub.s32 %s14, %s21
      %p133 = scmp.eq.s32.totalorder %s132, 0
      %s135 = sadd.s32 %s134, 1
      %s136 = scalar_select %p133, %s134, %s135
      %p139 = pneg %p133
      %p140 = scmp.eq.s32.totalorder %s14, 1
      %p141 = por %p139, %p140
      %p142 = scmp.ne.s32.totalorder %s134, %s137
      %p143 = scmp.eq.s32.totalorder %s14, 0
      %p144 = por %p142, %p143
      %p145 = scmp.ne.s32.totalorder %s134, %s137
      %p146 = scmp.eq.s32.totalorder %s19, 1
      %p147 = por %p145, %p146
      %p148 = scmp.ne.s32.totalorder %s137, %s138
      %p149 = scmp.eq.s32.totalorder %s19, 0
      %p150 = por %p148, %p149
      %p151 = scmp.ne.s32.totalorder %s137, %s138
      %p152 = scmp.eq.s32.totalorder %s20, 1
      %p153 = por %p151, %p152
      %p155 = scmp.ne.s32.totalorder %s138, %s154
      %p156 = scmp.eq.s32.totalorder %s20, 0
      %p157 = por %p155, %p156
      %p158 = scmp.le.s32.totalorder 1, %s14
      %p159 = scmp.lt.s32.totalorder %s14, 3
      %p160 = pnand %p158, %p159
      %p161 = pneg %p160
      // Predicated region
      $region9: #{tpu_custom_call.1} parent=5 // pred_check
        _
      $region10: #{tpu_custom_call.1} parent=5 // pred_check_branch
        %163 = sbr.rel (%p160) target = $region12
      $region11: #{tpu_custom_call.1} parent=5 // pred_region
        %s164 = ssub.s32 %s14, 1
        // Predicated region
        $region13: #{tpu_custom_call.1} parent=11 // pred_check
          %p165 = pneg %p61
        $region14: #{tpu_custom_call.1} parent=11 // pred_check_branch
          %167 = sbr.rel (%p165) target = $region16
        $region15: #{tpu_custom_call.1} parent=11 // pred_region
          _
        $region16: #{tpu_custom_call.1} parent=11 // pred_fallthru
          _
        // Predicated region
        $region17: #{tpu_custom_call.1} parent=11 // pred_check
          %p168 = pneg %p82
        $region18: #{tpu_custom_call.1} parent=11 // pred_check_branch
          %170 = sbr.rel (%p168) target = $region20
        $region19: #{tpu_custom_call.1} parent=11 // pred_region
          _
        $region20: #{tpu_custom_call.1} parent=11 // pred_fallthru
          _
        // Predicated region
        $region21: #{tpu_custom_call.1} parent=11 // pred_check
          %p171 = pneg %p103
        $region22: #{tpu_custom_call.1} parent=11 // pred_check_branch
          %173 = sbr.rel (%p171) target = $region24
        $region23: #{tpu_custom_call.1} parent=11 // pred_region
          _
        $region24: #{tpu_custom_call.1} parent=11 // pred_fallthru
          _
        // Predicated region
        $region25: #{tpu_custom_call.1} parent=11 // pred_check
          %p174 = pneg %p124
        $region26: #{tpu_custom_call.1} parent=11 // pred_check_branch
          %176 = sbr.rel (%p174) target = $region28
        $region27: #{tpu_custom_call.1} parent=11 // pred_region
          _
        $region28: #{tpu_custom_call.1} parent=11 // pred_fallthru
          _
      $region12: #{tpu_custom_call.1} parent=5 // pred_fallthru
        _
      %p177 = scmp.lt.s32.totalorder %s14, 2
      // Predicated region
      $region29: #{tpu_custom_call.1} parent=5 // pred_check
        %p178 = pneg %p177
      $region30: #{tpu_custom_call.1} parent=5 // pred_check_branch
        %180 = sbr.rel (%p178) target = $region32
      $region31: #{tpu_custom_call.1} parent=5 // pred_region
        // Predicated region
        $region33: #{tpu_custom_call.1} parent=31 // pred_check
          %p181 = pneg %p34
        $region34: #{tpu_custom_call.1} parent=31 // pred_check_branch
          %183 = sbr.rel (%p181) target = $region36
        $region35: #{tpu_custom_call.1} parent=31 // pred_region
          %p184 = scmp.lt.s32.totalorder %s14, 1
          %s185 = scalar_select %p184, %s14, 1
          %s186 = smul.addr %s185, 2
          %s187 = smul.addr %s186, 8
          %s188 = scalar_lea.vmem %s0, %s187
        $region36: #{tpu_custom_call.1} parent=31 // pred_fallthru
          _
      $region32: #{tpu_custom_call.1} parent=5 // pred_fallthru
        _
      %p189 = scmp.le.s32.totalorder 1, %s14
      %p190 = scmp.lt.s32.totalorder %s14, 3
      %p191 = pnand %p189, %p190
      %p192 = pneg %p191
      // Predicated region
      $region37: #{tpu_custom_call.1} parent=5 // pred_check
        _
      $region38: #{tpu_custom_call.1} parent=5 // pred_check_branch
        %194 = sbr.rel (%p191) target = $region40
      $region39: #{tpu_custom_call.1} parent=5 // pred_region
        %s195 = ssub.s32 %s14, 1
        %p196 = scmp.lt.s32.totalorder %s19, 1
        %s197 = scalar_select %p196, %s19, 1
        %s198 = smul.addr %s197, 2
        %s199 = smul.addr %s198, 8
        %s200 = scalar_lea.vmem %s0, %s199
        %p201 = pneg %p40
        %p202 = pneg %p37
        %p203 = pneg %p61
        %p204 = pneg %p58
        %p205 = pneg %p82
        %p206 = pneg %p79
        %p207 = pneg %p103
        %p208 = pneg %p100
        %p209 = pneg %p124
        %p210 = pneg %p121
        %p211 = pneg %p150
        %p212 = pneg %p147
        %s213 = sand.u32 %s137, 1
        %s214 = scalar_lea.sflag [#allocation3], %s213
        %s215 = sand.u32 %s137, 1
        %s216 = smul.addr %s215, 4
        %s217 = scalar_lea.vmem [#allocation2], %s216
        %p218 = scmp.lt.s32.totalorder %s19, 1
        %s219 = scalar_select %p218, %s19, 1
        %s220 = smul.addr %s219, 2
        %s221 = smul.addr %s220, 8
        %s222 = scalar_lea.vmem %s0, %s221
        %v223 = vld [vmem:[%s222] sm:$0xff]
        %v224 = vld [vmem:[%s222 + $0x8] sm:$0xf]
        %v225 = vld [vmem:[%s1] sm:$0xff]
        %v226 = vld [vmem:[%s1 + $0x8] sm:$0xff]
        %v227 = vld [vmem:[%s1 + $0x10] sm:$0xff]
        %v228 = vld [vmem:[%s1 + $0x18] sm:$0xff]
        %v229 = vld [vmem:[%s2] sm:$0xff]
        %v230 = vld [vmem:[%s2 + $0x8] sm:$0xff]
        %v231 = vld [vmem:[%s2 + $0x10] sm:$0xff]
        %v232 = vld [vmem:[%s2 + $0x18] sm:$0xff]
        %234 = vset.pattern.permute.xlu0 0
        %235 = vperm.xlu0 %234, %v229
        %v236 = vpop.permute.xlu0 %235
        %239 = vset.pattern.permute.xlu0 0
        %240 = vperm.xlu0 %239, %v230
        %v241 = vpop.permute.xlu0 %240
        %244 = vset.pattern.permute.xlu0 0
        %245 = vperm.xlu0 %244, %v231
        %v246 = vpop.permute.xlu0 %245
        %249 = vset.pattern.permute.xlu0 0
        %250 = vperm.xlu0 %249, %v232
        %v251 = vpop.permute.xlu0 %250
        %vm253 = vcmask 97280
        %v255 = vsel %vm253, %v225, 0
        %v258 = vsel %vm253, %v226, 0
        %v261 = vsel %vm253, %v227, 0
        %v264 = vsel %vm253, %v228, 0
        %vm266 = vcmask 1043456
        %v268 = vsel %vm266, %v224, 0
        %270 = vmatprep.subr.mxu0 0.0
        %271 = vmatpush1.msra.mxu0 0.0
        %272 = vmatprep.subr.mxu0 0.0
        %273 = vmatpush1.msra.mxu0 0.0
        %274 = vmatprep.subr.mxu0 0.0
        %275 = vmatpush1.msra.mxu0 0.0
        %276 = vmatprep.subr.mxu0 0.0
        %277 = vmatpush1.msra.mxu0 0.0
        %278 = vmatprep.subr.mxu0 0.0
        %279 = vmatpush1.msra.mxu0 0.0
        %280 = vmatprep.subr.mxu0 0.0
        %281 = vmatpush1.msra.mxu0 0.0
        %282 = vmatprep.subr.mxu0 0.0
        %283 = vmatpush1.msra.mxu0 0.0
        %284 = vmatprep.subr.mxu0 0.0
        %285 = vmatpush1.msra.mxu0 0.0
        %286 = vmatprep.subr.mxu0 0.0
        %287 = vmatpush1.msra.mxu0 0.0
        %288 = vmatprep.subr.mxu0 0.0
        %289 = vmatpush1.msra.mxu0 0.0
        %290 = vmatprep.subr.mxu0 0.0
        %291 = vmatpush1.msra.mxu0 0.0
        %292 = vmatprep.subr.mxu0 0.0
        %293 = vmatpush1.msra.mxu0 0.0
        %294 = vmatprep.subr.mxu0 0.0
        %295 = vmatpush1.msra.mxu0 0.0
        %296 = vmatprep.subr.mxu0 0.0
        %297 = vmatpush1.msra.mxu0 0.0
        %298 = vmatprep.subr.mxu0 0.0
        %299 = vmatpush1.msra.mxu0 %v268
        %300 = vmatprep.subr.mxu0 0.0
        %301 = vmatpush1.msra.mxu0 %v223
        %302 = vmatprep.subr.mxu0 0.0
        %303 = vmatpush2.msra.mxu0 0.0
        %304 = vmatprep.subr.mxu0 0.0
        %305 = vmatpush2.msra.mxu0 0.0
        %306 = vmatprep.subr.mxu0 0.0
        %307 = vmatpush2.msra.mxu0 0.0
        %308 = vmatprep.subr.mxu0 0.0
        %309 = vmatpush2.msra.mxu0 0.0
        %310 = vmatprep.subr.mxu0 0.0
        %311 = vmatpush2.msra.mxu0 0.0
        %312 = vmatprep.subr.mxu0 0.0
        %313 = vmatpush2.msra.mxu0 0.0
        %314 = vmatprep.subr.mxu0 0.0
        %315 = vmatpush2.msra.mxu0 0.0
        %316 = vmatprep.subr.mxu0 0.0
        %317 = vmatpush2.msra.mxu0 0.0
        %318 = vmatprep.subr.mxu0 0.0
        %319 = vmatpush2.msra.mxu0 0.0
        %320 = vmatprep.subr.mxu0 0.0
        %321 = vmatpush2.msra.mxu0 0.0
        %322 = vmatprep.subr.mxu0 0.0
        %323 = vmatpush2.msra.mxu0 0.0
        %324 = vmatprep.subr.mxu0 0.0
        %325 = vmatpush2.msra.mxu0 0.0
        %326 = vmatprep.subr.mxu0 0.0
        %327 = vmatpush2.msra.mxu0 0.0
        %328 = vmatprep.subr.mxu0 0.0
        %329 = vmatpush2.msra.mxu0 0.0
        %330 = vmatprep.subr.mxu0 0.0
        %331 = vmatpush2.msra.mxu0 0.0
        %332 = vmatprep.subr.mxu0 0.0
        %333 = vmatpush2.msra.mxu0 0.0
        %334 = vmatprep.mubr.f32.mxu0 0.0
        %335 = vmatmul.mubr.f32.gmra.mxu0 %v255
        %v336 = vpop.f32.mrf.mxu0
        %v337 = vadd.f32 %v236, %v336
        %v338 = vpop.f32.mrf.mxu0
        %339 = vmatprep.mubr.f32.mxu0 0.0
        %340 = vmatmul.mubr.f32.gmra.mxu0 %v258
        %v341 = vpop.f32.mrf.mxu0
        %v342 = vadd.f32 %v241, %v341
        %v343 = vpop.f32.mrf.mxu0
        %344 = vmatprep.mubr.f32.mxu0 0.0
        %345 = vmatmul.mubr.f32.gmra.mxu0 %v261
        %v346 = vpop.f32.mrf.mxu0
        %v347 = vadd.f32 %v246, %v346
        %v348 = vpop.f32.mrf.mxu0
        %349 = vmatprep.mubr.f32.mxu0 0.0
        %350 = vmatmul.mubr.f32.gmra.mxu0 %v264
        %v351 = vpop.f32.mrf.mxu0
        %v352 = vadd.f32 %v251, %v351
        %v353 = vpop.f32.mrf.mxu0
        %354 = vdwg.mxu0
        %v355 = vmax.f32 %v337, 0.0
        %v356 = vmax.f32 %v342, 0.0
        %v357 = vmax.f32 %v347, 0.0
        %v358 = vmax.f32 %v352, 0.0
        %v359 = vld [vmem:[%s3] sm:$0xf]
        %v360 = vld [vmem:[%s4] sm:$0xf]
        %362 = vset.pattern.permute.xlu0 0
        %363 = vperm.xlu0 %362, %v360
        %v364 = vpop.permute.xlu0 %363
        %vm366 = vcmask 261120
        %v368 = vsel %vm366, %v359, 0
        %370 = vmatprep.subr.mxu0 0.0
        %371 = vmatpush1.msra.mxu0 0.0
        %372 = vmatprep.subr.mxu0 0.0
        %373 = vmatpush1.msra.mxu0 0.0
        %374 = vmatprep.subr.mxu0 0.0
        %375 = vmatpush1.msra.mxu0 0.0
        %376 = vmatprep.subr.mxu0 0.0
        %377 = vmatpush1.msra.mxu0 0.0
        %378 = vmatprep.subr.mxu0 0.0
        %379 = vmatpush1.msra.mxu0 0.0
        %380 = vmatprep.subr.mxu0 0.0
        %381 = vmatpush1.msra.mxu0 0.0
        %382 = vmatprep.subr.mxu0 0.0
        %383 = vmatpush1.msra.mxu0 0.0
        %384 = vmatprep.subr.mxu0 0.0
        %385 = vmatpush1.msra.mxu0 0.0
        %386 = vmatprep.subr.mxu0 0.0
        %387 = vmatpush1.msra.mxu0 0.0
        %388 = vmatprep.subr.mxu0 0.0
        %389 = vmatpush1.msra.mxu0 0.0
        %390 = vmatprep.subr.mxu0 0.0
        %391 = vmatpush1.msra.mxu0 0.0
        %392 = vmatprep.subr.mxu0 0.0
        %393 = vmatpush1.msra.mxu0 0.0
        %394 = vmatprep.subr.mxu0 0.0
        %395 = vmatpush1.msra.mxu0 %v358
        %396 = vmatprep.subr.mxu0 0.0
        %397 = vmatpush1.msra.mxu0 %v357
        %398 = vmatprep.subr.mxu0 0.0
        %399 = vmatpush1.msra.mxu0 %v356
        %400 = vmatprep.subr.mxu0 0.0
        %401 = vmatpush1.msra.mxu0 %v355
        %402 = vmatprep.subr.mxu0 0.0
        %403 = vmatpush2.msra.mxu0 0.0
        %404 = vmatprep.subr.mxu0 0.0
        %405 = vmatpush2.msra.mxu0 0.0
        %406 = vmatprep.subr.mxu0 0.0
        %407 = vmatpush2.msra.mxu0 0.0
        %408 = vmatprep.subr.mxu0 0.0
        %409 = vmatpush2.msra.mxu0 0.0
        %410 = vmatprep.subr.mxu0 0.0
        %411 = vmatpush2.msra.mxu0 0.0
        %412 = vmatprep.subr.mxu0 0.0
        %413 = vmatpush2.msra.mxu0 0.0
        %414 = vmatprep.subr.mxu0 0.0
        %415 = vmatpush2.msra.mxu0 0.0
        %416 = vmatprep.subr.mxu0 0.0
        %417 = vmatpush2.msra.mxu0 0.0
        %418 = vmatprep.subr.mxu0 0.0
        %419 = vmatpush2.msra.mxu0 0.0
        %420 = vmatprep.subr.mxu0 0.0
        %421 = vmatpush2.msra.mxu0 0.0
        %422 = vmatprep.subr.mxu0 0.0
        %423 = vmatpush2.msra.mxu0 0.0
        %424 = vmatprep.subr.mxu0 0.0
        %425 = vmatpush2.msra.mxu0 0.0
        %426 = vmatprep.subr.mxu0 0.0
        %427 = vmatpush2.msra.mxu0 0.0
        %428 = vmatprep.subr.mxu0 0.0
        %429 = vmatpush2.msra.mxu0 0.0
        %430 = vmatprep.subr.mxu0 0.0
        %431 = vmatpush2.msra.mxu0 0.0
        %432 = vmatprep.subr.mxu0 0.0
        %433 = vmatpush2.msra.mxu0 0.0
        %434 = vmatprep.mubr.f32.mxu0 0.0
        %435 = vmatmul.mubr.f32.gmra.mxu0 %v368
        %v436 = vpop.f32.mrf.mxu0
        %v437 = vadd.f32 %v364, %v436
        %v438 = vpop.f32.mrf.mxu0
        %439 = vdwg.mxu0
        %v440 = vmax.f32 %v437, 0.0
        %v441 = vld [vmem:[%s222 + $0x4] sm:$0xf]
        %v442 = vadd.f32 %v440, %v441
        %vm443 = vcmask 125952
        %444 = vst.msk [vmem:[%s217] sm:$0xf] %vm443, %v442
        %s445 = sand.u32 %s137, 1
        %s446 = scalar_lea.sflag [#allocation3], %s445
        %s447 = sand.u32 %s137, 1
        %s448 = smul.addr %s447, 4
        %s449 = scalar_lea.vmem [#allocation2], %s448
        // Predicated region
        $region41: #{tpu_custom_call.1} parent=39 // pred_check
          %p450 = pneg %p147
        $region42: #{tpu_custom_call.1} parent=39 // pred_check_branch
          %452 = sbr.rel (%p450) target = $region44
        $region43: #{tpu_custom_call.1} parent=39 // pred_region
          %s454 = ssub.s32 64, 64
          %455 = vsyncadd %s446, %s454
          %s456 = smul.addr %s19, 64
          %s457 = scalar_lea.hbm %s5, %s456
          %s459 = sshll.u32 %s449, 4
          %s460 = int_to_ptr.vmem [resolvable:$true] %s459
          %462 = dma.vmem_to_hbm [thread:$0]  %s460, 64, %s457, %s446
        $region44: #{tpu_custom_call.1} parent=39 // pred_fallthru
          _
      $region40: #{tpu_custom_call.1} parent=5 // pred_fallthru
        _
      %p463 = scmp.le.s32.totalorder 2, %s14
      // Predicated region
      $region45: #{tpu_custom_call.1} parent=5 // pred_check
        %p464 = pneg %p463
      $region46: #{tpu_custom_call.1} parent=5 // pred_check_branch
        %466 = sbr.rel (%p464) target = $region48
      $region47: #{tpu_custom_call.1} parent=5 // pred_region
        %s467 = ssub.s32 %s14, 2
        // Predicated region
        $region49: #{tpu_custom_call.1} parent=47 // pred_check
          %p468 = pneg %p153
        $region50: #{tpu_custom_call.1} parent=47 // pred_check_branch
          %470 = sbr.rel (%p468) target = $region52
        $region51: #{tpu_custom_call.1} parent=47 // pred_region
          %s471 = sand.u32 %s138, 1
          %s472 = scalar_lea.sflag [#allocation3], %s471
          %s473 = sand.u32 %s138, 1
          %s474 = smul.addr %s473, 4
          %s475 = scalar_lea.vmem [#allocation2], %s474
          %476 = dma.done %s472, 64
        $region52: #{tpu_custom_call.1} parent=47 // pred_fallthru
          _
      $region48: #{tpu_custom_call.1} parent=5 // pred_fallthru
        _
    $region6: #{tpu_custom_call.1} parent=1 // loop_footer
      %s18 = sadd.s32 1, %s14
    $region7: #{tpu_custom_call.1} parent=1 // loop_footer_branch
      %13 = sbr.rel target = $region3
    $region8: #{tpu_custom_call.1} parent=1 // loop_exit
      _
    %477 = vsyncpa [#allocation3], 1
    %s478 = scalar_lea.sflag [#allocation3], 1
    %479 = vsyncpa %s478, 1

</llo_original>
